<compile_context>
chip_gen: v7x
topology: tpu7x:2x2x1
jax: 0.10.0
libtpu: 0.0.40
codegen_flags: <defaults>
</compile_context>

<pallas_src>
import jax
import jax.numpy as jnp
from jax.experimental import pallas as pl
from jax.experimental.pallas import tpu as pltpu

LN_EPS = 1e-5  # PyTorch nn.LayerNorm default


def mc_probing_head_kernel(x_ref, w1_ref, b1_ref, g_ref, beta_ref, w2_ref, b2_ref,
                           out_ref):
    # x: (TILE_N, D) bf16   w1: (D, H) bf16
    # b1/g/beta/w2: (1, H) f32   b2: (1, 1) f32
    # out: (1, TILE_N) f32  (lane-dense row of logits for this tile)

    # Linear(input_size, hidden): bf16 MXU operands, fp32 accumulation.
    h = jnp.dot(x_ref[...], w1_ref[...], preferred_element_type=jnp.float32)
    h = h + b1_ref[...]

    # Tanh (EUP) — fp32 activation path (safe on v5e).
    h = jnp.tanh(h)

    # LayerNorm(hidden): fused single-pass stats (biased variance, matches torch).
    inv_h = 1.0 / h.shape[-1]
    s = jnp.sum(h, axis=-1, keepdims=True)
    ss = jnp.sum(h * h, axis=-1, keepdims=True)
    mean = s * inv_h
    var = ss * inv_h - mean * mean          # fine post-tanh (|h| <= 1)
    h = (h - mean) * jax.lax.rsqrt(var + LN_EPS)
    h = h * g_ref[...] + beta_ref[...]

    # Dropout(hidden_dropout): identity at inference time (eval mode).

    # Linear(hidden, 1): contract H of w2 (1,H) against H of h (TILE_N,H) so the
    # result is a wide (1, TILE_N) row — avoids a width-1 MXU output and a
    # sublane->lane transpose before the store.
    logits_row = jax.lax.dot_general(
        w2_ref[...], h,
        dimension_numbers=(((1,), (1,)), ((), ())),
        preferred_element_type=jnp.float32)
    out_ref[...] = logits_row + b2_ref[...]


def _choose_tile_n(n_rows, d):
    """Largest row tile from {2048,1024,512,256,128} whose double-buffered bf16
    x tile stays within a conservative VMEM budget and doesn't over-pad tiny N."""
    budgets = {2048: 12 * 1024 * 1024,
               1024: 8 * 1024 * 1024,
               512: 8 * 1024 * 1024,
               256: 8 * 1024 * 1024}
    for cand in (2048, 1024, 512, 256):
        if n_rows >= cand and 2 * cand * d * 2 <= budgets[cand]:
            return cand
    return 128


def mc_probing_head_forward(inputs, params, labels=None, is_challenge=False):
    """inputs: (batch, num_choices, input_size) float32.  Returns (logits, loss)."""
    batch, num_choices, input_size = inputs.shape
    N = batch * num_choices
    D = input_size

    # Parameters: bf16 for the big MXU operand, fp32 for bias/LN/final proj.
    w1 = params["w1"].astype(jnp.bfloat16)                 # (D, H)
    b1 = params["b1"].astype(jnp.float32)                  # (1, H)
    gamma = params["gamma"].astype(jnp.float32)            # (1, H)
    beta = params["beta"].astype(jnp.float32)              # (1, H)
    w2 = params["w2"].reshape(1, -1).astype(jnp.float32)   # (1, H)
    b2 = params["b2"].reshape(1, 1).astype(jnp.float32)    # (1, 1)
    H = w1.shape[1]

    tile_n = _choose_tile_n(N, D)
    n_pad = pl.cdiv(N, tile_n) * tile_n
    x2d = inputs.reshape(N, D)
    x_pad = jnp.pad(x2d, ((0, n_pad - N), (0, 0))).astype(jnp.bfloat16)

    grid = (n_pad // tile_n,)

    # VMEM budget: resident weights + double-buffered x tile + output tile.
    weight_bytes = (w1.size * 2
                    + (b1.size + gamma.size + beta.size + w2.size + b2.size) * 4)
    x_tile_bytes = tile_n * D * 2
    out_tile_bytes = tile_n * 4
    needed = weight_bytes + 2 * x_tile_bytes + 2 * out_tile_bytes
    vmem_limit = int(min(64 * 1024 * 1024,
                         max(2 * needed + (2 << 20), 8 * 1024 * 1024)))

    cost = pl.CostEstimate(
        flops=2 * n_pad * D * H + 2 * n_pad * H + 10 * n_pad * H,
        transcendentals=n_pad * H + n_pad,            # tanh + rsqrt
        bytes_accessed=x_pad.size * 2 + weight_bytes + n_pad * 4,
    )

    logits_row = pl.pallas_call(
        mc_probing_head_kernel,
        out_shape=jax.ShapeDtypeStruct((1, n_pad), jnp.float32),
        grid_spec=pltpu.PrefetchScalarGridSpec(
            num_scalar_prefetch=0,
            grid=grid,
            in_specs=[
                pl.BlockSpec((tile_n, D), lambda i: (i, 0)),   # x: streamed per tile
                pl.BlockSpec((D, H), lambda i: (0, 0)),        # w1: resident
                pl.BlockSpec((1, H), lambda i: (0, 0)),        # b1
                pl.BlockSpec((1, H), lambda i: (0, 0)),        # gamma
                pl.BlockSpec((1, H), lambda i: (0, 0)),        # beta
                pl.BlockSpec((1, H), lambda i: (0, 0)),        # w2 (row)
                pl.BlockSpec((1, 1), lambda i: (0, 0)),        # b2
            ],
            out_specs=pl.BlockSpec((1, tile_n), lambda i: (0, i)),
        ),
        compiler_params=pltpu.CompilerParams(
            dimension_semantics=("parallel",),
            vmem_limit_bytes=vmem_limit,
        ),
        cost_estimate=cost,
    )(x_pad, w1, b1, gamma, beta, w2, b2)

    logits = logits_row[0, :N].reshape(batch, num_choices)

    loss = None
    if labels is not None:
        if not is_challenge:
            # nn.CrossEntropyLoss (mean reduction) — tiny reduction, plain JAX glue.
            logp = jax.nn.log_softmax(logits, axis=-1)
            loss = -jnp.mean(jnp.take_along_axis(logp, labels[:, None], axis=-1))
        else:
            # nn.BCEWithLogitsLoss with one-hot targets (mean over all elements).
            y = jax.nn.one_hot(labels, num_choices, dtype=logits.dtype)
            z = logits
            loss = jnp.mean(jnp.maximum(z, 0.0) - z * y
                            + jnp.log1p(jnp.exp(-jnp.abs(z))))
    return logits, loss


def _reference_forward(inputs, params, labels=None, is_challenge=False):
    """Pure-JAX fp32 reference for correctness checking."""
    b, c, d = inputs.shape
    x = inputs.reshape(-1, d)
    h = x @ params["w1"] + params["b1"]
    h = jnp.tanh(h)
    mean = jnp.mean(h, axis=-1, keepdims=True)
    var = jnp.mean((h - mean) ** 2, axis=-1, keepdims=True)
    h = (h - mean) / jnp.sqrt(var + LN_EPS)
    h = h * params["gamma"] + params["beta"]
    logits = (h @ params["w2"] + params["b2"]).reshape(b, c)
    loss = None
    if labels is not None:
        if not is_challenge:
            logp = jax.nn.log_softmax(logits, axis=-1)
            loss = -jnp.mean(jnp.take_along_axis(logp, labels[:, None], axis=-1))
        else:
            y = jax.nn.one_hot(labels, c, dtype=logits.dtype)
            loss = jnp.mean(jnp.maximum(logits, 0.0) - logits * y
                            + jnp.log1p(jnp.exp(-jnp.abs(logits))))
    return logits, loss


def init_params(key, input_size, hidden_size):
    k1, k2 = jax.random.split(key)
    return {
        "w1": 0.02 * jax.random.normal(k1, (input_size, hidden_size), jnp.float32),
        "b1": jnp.zeros((1, hidden_size), jnp.float32),
        "gamma": jnp.ones((1, hidden_size), jnp.float32),
        "beta": jnp.zeros((1, hidden_size), jnp.float32),
        "w2": 0.02 * jax.random.normal(k2, (hidden_size, 1), jnp.float32),
        "b2": jnp.zeros((1, 1), jnp.float32),
    }


if __name__ == "__main__":
    key = jax.random.PRNGKey(0)
    k_in, k_par, k_lab = jax.random.split(key, 3)

    batch, num_choices, input_size, hidden_size = 2, 2, 32, 32
    inputs = jax.random.normal(k_in, (batch, num_choices, input_size), jnp.float32)
    labels = jax.random.randint(k_lab, (batch,), 0, num_choices)
    params = init_params(k_par, input_size, hidden_size)

    logits, loss = mc_probing_head_forward(inputs, params, labels=labels)
    jax.block_until_ready((logits, loss))

    assert logits.shape == (batch, num_choices)
    assert loss.shape == ()
    assert bool(jnp.all(jnp.isfinite(logits))) and bool(jnp.isfinite(loss))

    # Loose tolerance: kernel uses bf16 MXU operands for the first matmul.
    ref_logits, ref_loss = _reference_forward(inputs, params, labels=labels)
    assert bool(jnp.allclose(logits, ref_logits, atol=5e-2, rtol=5e-2))
    assert bool(jnp.allclose(loss, ref_loss, atol=5e-2, rtol=5e-2))

    print("KERNEL_OK")
</pallas_src>

<mosaic_0001>
module attributes {stable_mosaic.version = 11 : i64} {
  func.func @mc_probing_head_kernel(%arg0: i32, %arg1: memref<128x32xbf16, #tpu.memory_space<vmem>>, %arg2: memref<32x32xbf16, #tpu.memory_space<vmem>>, %arg3: memref<1x32xf32, #tpu.memory_space<vmem>>, %arg4: memref<1x32xf32, #tpu.memory_space<vmem>>, %arg5: memref<1x32xf32, #tpu.memory_space<vmem>>, %arg6: memref<1x32xf32, #tpu.memory_space<vmem>>, %arg7: memref<1x1xf32, #tpu.memory_space<vmem>>, %arg8: memref<1x128xf32, #tpu.memory_space<vmem>>) attributes {dimension_semantics = [#tpu.dimension_semantics<parallel>], iteration_bounds = array<i64: 1>, scalar_prefetch = 0 : i64, scratch_operands = 0 : i64, tpu.core_type = #tpu.core_type<tc>, window_params = [{transform_indices = @transform_0, window_bounds = array<i64: 128, 32>}, {pipeline_mode = #tpu.pipeline_mode<synchronous>, transform_indices = @transform_1, window_bounds = array<i64: 32, 32>}, {pipeline_mode = #tpu.pipeline_mode<synchronous>, transform_indices = @transform_2, window_bounds = array<i64: 1, 32>}, {pipeline_mode = #tpu.pipeline_mode<synchronous>, transform_indices = @transform_3, window_bounds = array<i64: 1, 32>}, {pipeline_mode = #tpu.pipeline_mode<synchronous>, transform_indices = @transform_4, window_bounds = array<i64: 1, 32>}, {pipeline_mode = #tpu.pipeline_mode<synchronous>, transform_indices = @transform_5, window_bounds = array<i64: 1, 32>}, {pipeline_mode = #tpu.pipeline_mode<synchronous>, transform_indices = @transform_6, window_bounds = array<i64: 1, 1>}, {transform_indices = @transform_7, window_bounds = array<i64: 1, 128>}]} {
    %c0 = arith.constant 0 : index
    %c0_0 = arith.constant 0 : index
    %0 = vector.load %arg1[%c0, %c0_0] : memref<128x32xbf16, #tpu.memory_space<vmem>>, vector<128x32xbf16>
    %c0_1 = arith.constant 0 : index
    %c0_2 = arith.constant 0 : index
    %1 = vector.load %arg2[%c0_1, %c0_2] : memref<32x32xbf16, #tpu.memory_space<vmem>>, vector<32x32xbf16>
    %cst = arith.constant dense<0.000000e+00> : vector<128x32xf32>
    %2 = tpu.matmul %0, %1, %cst {dimension_numbers = #tpu.dot_dimension_numbers<[1], [0], [0], [1], [0, 0, 1, 1], [], []>} : vector<128x32xbf16>, vector<32x32xbf16>, vector<128x32xf32> -> vector<128x32xf32>
    %c0_3 = arith.constant 0 : index
    %c0_4 = arith.constant 0 : index
    %3 = vector.load %arg3[%c0_3, %c0_4] : memref<1x32xf32, #tpu.memory_space<vmem>>, vector<1x32xf32>
    %4 = vector.broadcast %3 : vector<1x32xf32> to vector<128x32xf32>
    %5 = arith.addf %2, %4 : vector<128x32xf32>
    %6 = math.tanh %5 : vector<128x32xf32>
    %cst_5 = arith.constant dense<0.000000e+00> : vector<128xf32>
    %7 = vector.multi_reduction <add>, %6, %cst_5 [1] : vector<128x32xf32> to vector<128xf32>
    %8 = vector.shape_cast %7 : vector<128xf32> to vector<128x1xf32>
    %9 = arith.mulf %6, %6 : vector<128x32xf32>
    %cst_6 = arith.constant dense<0.000000e+00> : vector<128xf32>
    %10 = vector.multi_reduction <add>, %9, %cst_6 [1] : vector<128x32xf32> to vector<128xf32>
    %11 = vector.shape_cast %10 : vector<128xf32> to vector<128x1xf32>
    %cst_7 = arith.constant 3.125000e-02 : f32
    %12 = vector.broadcast %cst_7 : f32 to vector<128x1xf32>
    %13 = arith.mulf %8, %12 : vector<128x1xf32>
    %cst_8 = arith.constant 3.125000e-02 : f32
    %14 = vector.broadcast %cst_8 : f32 to vector<128x1xf32>
    %15 = arith.mulf %11, %14 : vector<128x1xf32>
    %16 = arith.mulf %13, %13 : vector<128x1xf32>
    %17 = arith.subf %15, %16 : vector<128x1xf32>
    %18 = vector.broadcast %13 : vector<128x1xf32> to vector<128x32xf32>
    %19 = arith.subf %6, %18 : vector<128x32xf32>
    %cst_9 = arith.constant 9.99999974E-6 : f32
    %20 = vector.broadcast %cst_9 : f32 to vector<128x1xf32>
    %21 = arith.addf %17, %20 : vector<128x1xf32>
    %22 = math.rsqrt %21 : vector<128x1xf32>
    %23 = vector.broadcast %22 : vector<128x1xf32> to vector<128x32xf32>
    %24 = arith.mulf %19, %23 : vector<128x32xf32>
    %c0_10 = arith.constant 0 : index
    %c0_11 = arith.constant 0 : index
    %25 = vector.load %arg4[%c0_10, %c0_11] : memref<1x32xf32, #tpu.memory_space<vmem>>, vector<1x32xf32>
    %26 = vector.broadcast %25 : vector<1x32xf32> to vector<128x32xf32>
    %27 = arith.mulf %24, %26 : vector<128x32xf32>
    %c0_12 = arith.constant 0 : index
    %c0_13 = arith.constant 0 : index
    %28 = vector.load %arg5[%c0_12, %c0_13] : memref<1x32xf32, #tpu.memory_space<vmem>>, vector<1x32xf32>
    %29 = vector.broadcast %28 : vector<1x32xf32> to vector<128x32xf32>
    %30 = arith.addf %27, %29 : vector<128x32xf32>
    %c0_14 = arith.constant 0 : index
    %c0_15 = arith.constant 0 : index
    %31 = vector.load %arg6[%c0_14, %c0_15] : memref<1x32xf32, #tpu.memory_space<vmem>>, vector<1x32xf32>
    %cst_16 = arith.constant dense<0.000000e+00> : vector<1x128xf32>
    %32 = tpu.matmul %31, %30, %cst_16 {dimension_numbers = #tpu.dot_dimension_numbers<[1], [1], [0], [0], [0, 0, 1, 0], [], []>} : vector<1x32xf32>, vector<128x32xf32>, vector<1x128xf32> -> vector<1x128xf32>
    %c0_17 = arith.constant 0 : index
    %c0_18 = arith.constant 0 : index
    %33 = vector.load %arg7[%c0_17, %c0_18] : memref<1x1xf32, #tpu.memory_space<vmem>>, vector<1x1xf32>
    %34 = vector.broadcast %33 : vector<1x1xf32> to vector<1x128xf32>
    %35 = arith.addf %32, %34 : vector<1x128xf32>
    %c0_19 = arith.constant 0 : index
    %c0_20 = arith.constant 0 : index
    %36 = vector.load %arg8[%c0_19, %c0_20] : memref<1x128xf32, #tpu.memory_space<vmem>>, vector<1x128xf32>
    tpu.vector_store %arg8[%c0_19, %c0_20], %35 {strides = array<i32>} : memref<1x128xf32, #tpu.memory_space<vmem>>, vector<1x128xf32>,
    return
  }
  func.func @transform_0(%arg0: i32) -> (i32, i32) {
    %c0_i32 = arith.constant 0 : i32
    %c0_i32_0 = arith.constant 0 : i32
    return %arg0, %c0_i32 : i32, i32
  }
  func.func @transform_1(%arg0: i32) -> (i32, i32) {
    %c0_i32 = arith.constant 0 : i32
    %c0_i32_0 = arith.constant 0 : i32
    %c0_i32_1 = arith.constant 0 : i32
    return %c0_i32, %c0_i32_0 : i32, i32
  }
  func.func @transform_2(%arg0: i32) -> (i32, i32) {
    %c0_i32 = arith.constant 0 : i32
    %c0_i32_0 = arith.constant 0 : i32
    %c0_i32_1 = arith.constant 0 : i32
    return %c0_i32, %c0_i32_0 : i32, i32
  }
  func.func @transform_3(%arg0: i32) -> (i32, i32) {
    %c0_i32 = arith.constant 0 : i32
    %c0_i32_0 = arith.constant 0 : i32
    %c0_i32_1 = arith.constant 0 : i32
    return %c0_i32, %c0_i32_0 : i32, i32
  }
  func.func @transform_4(%arg0: i32) -> (i32, i32) {
    %c0_i32 = arith.constant 0 : i32
    %c0_i32_0 = arith.constant 0 : i32
    %c0_i32_1 = arith.constant 0 : i32
    return %c0_i32, %c0_i32_0 : i32, i32
  }
  func.func @transform_5(%arg0: i32) -> (i32, i32) {
    %c0_i32 = arith.constant 0 : i32
    %c0_i32_0 = arith.constant 0 : i32
    %c0_i32_1 = arith.constant 0 : i32
    return %c0_i32, %c0_i32_0 : i32, i32
  }
  func.func @transform_6(%arg0: i32) -> (i32, i32) {
    %c0_i32 = arith.constant 0 : i32
    %c0_i32_0 = arith.constant 0 : i32
    %c0_i32_1 = arith.constant 0 : i32
    return %c0_i32, %c0_i32_0 : i32, i32
  }
  func.func @transform_7(%arg0: i32) -> (i32, i32) {
    %c0_i32 = arith.constant 0 : i32
    %c0_i32_0 = arith.constant 0 : i32
    return %c0_i32, %arg0 : i32, i32
  }
}

</mosaic_0001>

<llo_original>
// kernel: tpu_custom_call.1
$region0: #{tpu_custom_call.1}
  #allocation0 [shape = 'u32[]', space=smem, size = 0x4, offset = 0x4, fixed_abs, tag = 'smem constant byte address 0x4 - core index']
  #allocation1 [shape = 'u32[144,128]{1,0:T(1,128)}', space=vmem, size = 0x12000, scoped, tag = 'internal scratch']
  #allocation2 [shape = 'f32[1,1]{1,0:T(1,128)S(1)}', space=vmem, size = 0x200, scoped, tag = 'scoped memory for tpu_custom_call.1']
  %s0 = inlined_call_operand.vmem [shape: bf16[128,32], index: 0, kind: input, shape index: {}]
  %s1 = inlined_call_operand.vmem [shape: bf16[32,32], index: 1, kind: input, shape index: {}]
  %s2 = inlined_call_operand.vmem [shape: f32[1,32], index: 2, kind: input, shape index: {}]
  %s3 = inlined_call_operand.vmem [shape: f32[1,32], index: 3, kind: input, shape index: {}]
  %s4 = inlined_call_operand.vmem [shape: f32[1,32], index: 4, kind: input, shape index: {}]
  %s5 = inlined_call_operand.vmem [shape: f32[1,32], index: 5, kind: input, shape index: {}]
  %s6 = inlined_call_operand.<no memory space> [shape: f32[1,1], index: 6, kind: input, shape index: {}]
  %s7 = inlined_call_operand.hbm [shape: f32[1,128], index: 7, kind: output, shape index: {}]
  %s8 = sld [smem:[#allocation0]]
  $region38: #{tpu_custom_call.1} parent=0
    _
  %s10 = ssub.s32 1, %s8
  %s11 = scalar_select 0, %s10, %s8
  %v12 = vstv %s6
  %13 = vst [vmem:[#allocation2] sm:$0x1] %v12
  $region1: #{tpu_custom_call.1} parent=0
    #allocation3 [shape = 'u8[512]{0}', space=vmem, size = 0x400, scoped, tag = 'output window, operand 0, single buffered']
    #allocation4 [shape = 's32[1]{0}', space=sflag, size = 0x4, scoped, tag = 'scoped memory for tpu_custom_call.1']
    %14 = vsyncpa [#allocation4], 0
    // Predicated region
    $region2: #{tpu_custom_call.1} parent=1 // pred_check
      _
    $region3: #{tpu_custom_call.1} parent=1 // pred_check_branch
      %16 = sbr.rel (0) target = $region5
    $region4: #{tpu_custom_call.1} parent=1 // pred_region
      _
    $region5: #{tpu_custom_call.1} parent=1 // pred_fallthru
      _
    // Predicated region
    $region6: #{tpu_custom_call.1} parent=1 // pred_check
      _
    $region7: #{tpu_custom_call.1} parent=1 // pred_check_branch
      %18 = sbr.rel (0) target = $region9
    $region8: #{tpu_custom_call.1} parent=1 // pred_region
      _
    $region9: #{tpu_custom_call.1} parent=1 // pred_fallthru
      _
    // Predicated region
    $region10: #{tpu_custom_call.1} parent=1 // pred_check
      _
    $region11: #{tpu_custom_call.1} parent=1 // pred_check_branch
      %20 = sbr.rel (0) target = $region13
    $region12: #{tpu_custom_call.1} parent=1 // pred_region
      _
    $region13: #{tpu_custom_call.1} parent=1 // pred_fallthru
      _
    // Predicated region
    $region14: #{tpu_custom_call.1} parent=1 // pred_check
      _
    $region15: #{tpu_custom_call.1} parent=1 // pred_check_branch
      %22 = sbr.rel (0) target = $region17
    $region16: #{tpu_custom_call.1} parent=1 // pred_region
      _
    $region17: #{tpu_custom_call.1} parent=1 // pred_fallthru
      _
    // Predicated region
    $region18: #{tpu_custom_call.1} parent=1 // pred_check
      _
    $region19: #{tpu_custom_call.1} parent=1 // pred_check_branch
      %24 = sbr.rel (0) target = $region21
    $region20: #{tpu_custom_call.1} parent=1 // pred_region
      _
    $region21: #{tpu_custom_call.1} parent=1 // pred_fallthru
      _
    // Predicated region
    $region22: #{tpu_custom_call.1} parent=1 // pred_check
      _
    $region23: #{tpu_custom_call.1} parent=1 // pred_check_branch
      %26 = sbr.rel (0) target = $region25
    $region24: #{tpu_custom_call.1} parent=1 // pred_region
      _
    $region25: #{tpu_custom_call.1} parent=1 // pred_fallthru
      _
    // Predicated region
    $region26: #{tpu_custom_call.1} parent=1 // pred_check
      _
    $region27: #{tpu_custom_call.1} parent=1 // pred_check_branch
      %28 = sbr.rel (0) target = $region29
    $region28: #{tpu_custom_call.1} parent=1 // pred_region
      _
    $region29: #{tpu_custom_call.1} parent=1 // pred_fallthru
      _
    %v30 = vld [vmem:[%s0] sm:$0xf]
    %v31 = vld [vmem:[%s0 + $0x4] sm:$0xf]
    %v32 = vld [vmem:[%s0 + $0x8] sm:$0xf]
    %v33 = vld [vmem:[%s0 + $0xc] sm:$0xf]
    %v34 = vld [vmem:[%s0 + $0x10] sm:$0xf]
    %v35 = vld [vmem:[%s0 + $0x14] sm:$0xf]
    %v36 = vld [vmem:[%s0 + $0x18] sm:$0xf]
    %v37 = vld [vmem:[%s0 + $0x1c] sm:$0xf]
    %v38 = vld [vmem:[%s0 + $0x20] sm:$0xf]
    %v39 = vld [vmem:[%s0 + $0x24] sm:$0xf]
    %v40 = vld [vmem:[%s0 + $0x28] sm:$0xf]
    %v41 = vld [vmem:[%s0 + $0x2c] sm:$0xf]
    %v42 = vld [vmem:[%s0 + $0x30] sm:$0xf]
    %v43 = vld [vmem:[%s0 + $0x34] sm:$0xf]
    %v44 = vld [vmem:[%s0 + $0x38] sm:$0xf]
    %v45 = vld [vmem:[%s0 + $0x3c] sm:$0xf]
    %v46 = vld [vmem:[%s1] sm:$0xf]
    %v47 = vld [vmem:[%s1 + $0x4] sm:$0xf]
    %v48 = vld [vmem:[%s1 + $0x8] sm:$0xf]
    %v49 = vld [vmem:[%s1 + $0xc] sm:$0xf]
    %v50 = vld [vmem:[%s2] sm:$0x1]
    %v52 = vlaneseq
    %v53 = vshrl.u32 %v52, 7
    %v54 = vsub.s32 0, %v53
    %v55 = vrot.slane %v50, %v54
    %v73 = vunpack.c.l.b16 %v30
    %v74 = vunpack.c.l.b16 %v31
    %v75 = vunpack.c.l.b16 %v32
    %v76 = vunpack.c.l.b16 %v33
    %v77 = vunpack.c.l.b16 %v34
    %v78 = vunpack.c.l.b16 %v35
    %v79 = vunpack.c.l.b16 %v36
    %v80 = vunpack.c.l.b16 %v37
    %v81 = vunpack.c.l.b16 %v38
    %v82 = vunpack.c.l.b16 %v39
    %v83 = vunpack.c.l.b16 %v40
    %v84 = vunpack.c.l.b16 %v41
    %v85 = vunpack.c.l.b16 %v42
    %v86 = vunpack.c.l.b16 %v43
    %v87 = vunpack.c.l.b16 %v44
    %v88 = vunpack.c.l.b16 %v45
    %v89 = vpack.c.b16 %v74, %v73
    %v90 = vpack.c.b16 %v76, %v75
    %v91 = vpack.c.b16 %v78, %v77
    %v92 = vpack.c.b16 %v80, %v79
    %v93 = vpack.c.b16 %v82, %v81
    %v94 = vpack.c.b16 %v84, %v83
    %v95 = vpack.c.b16 %v86, %v85
    %v96 = vpack.c.b16 %v88, %v87
    %v101 = vunpack.c.l.b16 %v46
    %v102 = vunpack.c.l.b16 %v47
    %v103 = vunpack.c.l.b16 %v48
    %v104 = vunpack.c.l.b16 %v49
    %v105 = vpack.c.b16 %v102, %v101
    %v106 = vpack.c.b16 %v104, %v103
    %vm109 = vcmask 261120
    %v111 = vsel %vm109, %v89, 0
    %v114 = vsel %vm109, %v90, 0
    %v117 = vsel %vm109, %v91, 0
    %v120 = vsel %vm109, %v92, 0
    %v123 = vsel %vm109, %v93, 0
    %v126 = vsel %vm109, %v94, 0
    %v129 = vsel %vm109, %v95, 0
    %v132 = vsel %vm109, %v96, 0
    %134 = vmatprep.subr.bf16.mxu0 0
    %135 = vmatpush1.bf16.msra.mxu0 %v105
    %136 = vmatprep.subr.bf16.mxu0 0
    %137 = vmatpush1.bf16.msra.mxu0 %v106
    %138 = vmatprep.subr.bf16.mxu0 0
    %139 = vmatpush1.bf16.msra.mxu0 0
    %140 = vmatprep.subr.bf16.mxu0 0
    %141 = vmatpush1.bf16.msra.mxu0 0
    %142 = vmatprep.subr.bf16.mxu0 0
    %143 = vmatpush1.bf16.msra.mxu0 0
    %144 = vmatprep.subr.bf16.mxu0 0
    %145 = vmatpush1.bf16.msra.mxu0 0
    %146 = vmatprep.subr.bf16.mxu0 0
    %147 = vmatpush1.bf16.msra.mxu0 0
    %148 = vmatprep.subr.bf16.mxu0 0
    %149 = vmatpush1.bf16.msra.mxu0 0
    %150 = vmatprep.subr.bf16.mxu0 0
    %151 = vmatpush1.bf16.msra.mxu0 0
    %152 = vmatprep.subr.bf16.mxu0 0
    %153 = vmatpush1.bf16.msra.mxu0 0
    %154 = vmatprep.subr.bf16.mxu0 0
    %155 = vmatpush1.bf16.msra.mxu0 0
    %156 = vmatprep.subr.bf16.mxu0 0
    %157 = vmatpush1.bf16.msra.mxu0 0
    %158 = vmatprep.subr.bf16.mxu0 0
    %159 = vmatpush1.bf16.msra.mxu0 0
    %160 = vmatprep.subr.bf16.mxu0 0
    %161 = vmatpush1.bf16.msra.mxu0 0
    %162 = vmatprep.subr.bf16.mxu0 0
    %163 = vmatpush1.bf16.msra.mxu0 0
    %164 = vmatprep.subr.bf16.mxu0 0
    %165 = vmatpush1.bf16.msra.mxu0 0
    %166 = vmatprep.mubr.bf16.mxu0 0
    %167 = vmatmul.mubr.bf16.gmra.mrb[0].mxu0 %v111
    %v168 = vpop.f32.mrb[0].mxu0
    %v169 = vadd.f32 %v55, %v168
    %v170 = vpop.f32.mrb[0].mxu0
    %v171 = vpop.f32.mrb[0].mxu0
    %v172 = vadd.f32 %v55, %v171
    %v173 = vpop.f32.mrb[0].mxu0
    %174 = vmatprep.mubr.bf16.mxu0 0
    %175 = vmatmul.mubr.bf16.gmra.mrb[0].mxu0 %v114
    %v176 = vpop.f32.mrb[0].mxu0
    %v177 = vadd.f32 %v55, %v176
    %v178 = vpop.f32.mrb[0].mxu0
    %v179 = vpop.f32.mrb[0].mxu0
    %v180 = vadd.f32 %v55, %v179
    %v181 = vpop.f32.mrb[0].mxu0
    %182 = vmatprep.mubr.bf16.mxu0 0
    %183 = vmatmul.mubr.bf16.gmra.mrb[0].mxu0 %v117
    %v184 = vpop.f32.mrb[0].mxu0
    %v185 = vadd.f32 %v55, %v184
    %v186 = vpop.f32.mrb[0].mxu0
    %v187 = vpop.f32.mrb[0].mxu0
    %v188 = vadd.f32 %v55, %v187
    %v189 = vpop.f32.mrb[0].mxu0
    %190 = vmatprep.mubr.bf16.mxu0 0
    %191 = vmatmul.mubr.bf16.gmra.mrb[0].mxu0 %v120
    %v192 = vpop.f32.mrb[0].mxu0
    %v193 = vadd.f32 %v55, %v192
    %v194 = vpop.f32.mrb[0].mxu0
    %v195 = vpop.f32.mrb[0].mxu0
    %v196 = vadd.f32 %v55, %v195
    %v197 = vpop.f32.mrb[0].mxu0
    %198 = vmatprep.mubr.bf16.mxu0 0
    %199 = vmatmul.mubr.bf16.gmra.mrb[0].mxu0 %v123
    %v200 = vpop.f32.mrb[0].mxu0
    %v201 = vadd.f32 %v55, %v200
    %v202 = vpop.f32.mrb[0].mxu0
    %v203 = vpop.f32.mrb[0].mxu0
    %v204 = vadd.f32 %v55, %v203
    %v205 = vpop.f32.mrb[0].mxu0
    %206 = vmatprep.mubr.bf16.mxu0 0
    %207 = vmatmul.mubr.bf16.gmra.mrb[0].mxu0 %v126
    %v208 = vpop.f32.mrb[0].mxu0
    %v209 = vadd.f32 %v55, %v208
    %v210 = vpop.f32.mrb[0].mxu0
    %v211 = vpop.f32.mrb[0].mxu0
    %v212 = vadd.f32 %v55, %v211
    %v213 = vpop.f32.mrb[0].mxu0
    %214 = vmatprep.mubr.bf16.mxu0 0
    %215 = vmatmul.mubr.bf16.gmra.mrb[0].mxu0 %v129
    %v216 = vpop.f32.mrb[0].mxu0
    %v217 = vadd.f32 %v55, %v216
    %v218 = vpop.f32.mrb[0].mxu0
    %v219 = vpop.f32.mrb[0].mxu0
    %v220 = vadd.f32 %v55, %v219
    %v221 = vpop.f32.mrb[0].mxu0
    %222 = vmatprep.mubr.bf16.mxu0 0
    %223 = vmatmul.mubr.bf16.gmra.mrb[0].mxu0 %v132
    %v224 = vpop.f32.mrb[0].mxu0
    %v225 = vadd.f32 %v55, %v224
    %v226 = vpop.f32.mrb[0].mxu0
    %v227 = vpop.f32.mrb[0].mxu0
    %v228 = vadd.f32 %v55, %v227
    %v229 = vpop.f32.mrb[0].mxu0
    %230 = vdwg.mxu0
    %v231 = vtanh.pop %v169
    %v232 = vtanh.pop %v172
    %v233 = vtanh.pop %v177
    %v234 = vtanh.pop %v180
    %v235 = vtanh.pop %v185
    %v236 = vtanh.pop %v188
    %v237 = vtanh.pop %v193
    %v238 = vtanh.pop %v196
    %v239 = vtanh.pop %v201
    %v240 = vtanh.pop %v204
    %v241 = vtanh.pop %v209
    %v242 = vtanh.pop %v212
    %v243 = vtanh.pop %v217
    %v244 = vtanh.pop %v220
    %v245 = vtanh.pop %v225
    %v246 = vtanh.pop %v228
    %v247 = vsel %vm109, %v231, 0.0
    %248 = vadd.xlane.f32.xlu0 %v247
    %v249 = vpop.xlane.xlu0 %248
    %v250 = vsel %vm109, %v232, 0.0
    %251 = vadd.xlane.f32.xlu0 %v250
    %v252 = vpop.xlane.xlu0 %251
    %v253 = vsel %vm109, %v233, 0.0
    %254 = vadd.xlane.f32.xlu0 %v253
    %v255 = vpop.xlane.xlu0 %254
    %v256 = vsel %vm109, %v234, 0.0
    %257 = vadd.xlane.f32.xlu0 %v256
    %v258 = vpop.xlane.xlu0 %257
    %v259 = vsel %vm109, %v235, 0.0
    %260 = vadd.xlane.f32.xlu0 %v259
    %v261 = vpop.xlane.xlu0 %260
    %v262 = vsel %vm109, %v236, 0.0
    %263 = vadd.xlane.f32.xlu0 %v262
    %v264 = vpop.xlane.xlu0 %263
    %v265 = vsel %vm109, %v237, 0.0
    %266 = vadd.xlane.f32.xlu0 %v265
    %v267 = vpop.xlane.xlu0 %266
    %v268 = vsel %vm109, %v238, 0.0
    %269 = vadd.xlane.f32.xlu0 %v268
    %v270 = vpop.xlane.xlu0 %269
    %v271 = vsel %vm109, %v239, 0.0
    %272 = vadd.xlane.f32.xlu0 %v271
    %v273 = vpop.xlane.xlu0 %272
    %v274 = vsel %vm109, %v240, 0.0
    %275 = vadd.xlane.f32.xlu0 %v274
    %v276 = vpop.xlane.xlu0 %275
    %v277 = vsel %vm109, %v241, 0.0
    %278 = vadd.xlane.f32.xlu0 %v277
    %v279 = vpop.xlane.xlu0 %278
    %v280 = vsel %vm109, %v242, 0.0
    %281 = vadd.xlane.f32.xlu0 %v280
    %v282 = vpop.xlane.xlu0 %281
    %v283 = vsel %vm109, %v243, 0.0
    %284 = vadd.xlane.f32.xlu0 %v283
    %v285 = vpop.xlane.xlu0 %284
    %v286 = vsel %vm109, %v244, 0.0
    %287 = vadd.xlane.f32.xlu0 %v286
    %v288 = vpop.xlane.xlu0 %287
    %v289 = vsel %vm109, %v245, 0.0
    %290 = vadd.xlane.f32.xlu0 %v289
    %v291 = vpop.xlane.xlu0 %290
    %v292 = vsel %vm109, %v246, 0.0
    %293 = vadd.xlane.f32.xlu0 %v292
    %v294 = vpop.xlane.xlu0 %293
    %v295 = vmul.f32 %v231, %v231
    %v296 = vmul.f32 %v232, %v232
    %v297 = vmul.f32 %v233, %v233
    %v298 = vmul.f32 %v234, %v234
    %v299 = vmul.f32 %v235, %v235
    %v300 = vmul.f32 %v236, %v236
    %v301 = vmul.f32 %v237, %v237
    %v302 = vmul.f32 %v238, %v238
    %v303 = vmul.f32 %v239, %v239
    %v304 = vmul.f32 %v240, %v240
    %v305 = vmul.f32 %v241, %v241
    %v306 = vmul.f32 %v242, %v242
    %v307 = vmul.f32 %v243, %v243
    %v308 = vmul.f32 %v244, %v244
    %v309 = vmul.f32 %v245, %v245
    %v310 = vmul.f32 %v246, %v246
    %v311 = vsel %vm109, %v295, 0.0
    %312 = vadd.xlane.f32.xlu0 %v311
    %v313 = vpop.xlane.xlu0 %312
    %v314 = vsel %vm109, %v296, 0.0
    %315 = vadd.xlane.f32.xlu0 %v314
    %v316 = vpop.xlane.xlu0 %315
    %v317 = vsel %vm109, %v297, 0.0
    %318 = vadd.xlane.f32.xlu0 %v317
    %v319 = vpop.xlane.xlu0 %318
    %v320 = vsel %vm109, %v298, 0.0
    %321 = vadd.xlane.f32.xlu0 %v320
    %v322 = vpop.xlane.xlu0 %321
    %v323 = vsel %vm109, %v299, 0.0
    %324 = vadd.xlane.f32.xlu0 %v323
    %v325 = vpop.xlane.xlu0 %324
    %v326 = vsel %vm109, %v300, 0.0
    %327 = vadd.xlane.f32.xlu0 %v326
    %v328 = vpop.xlane.xlu0 %327
    %v329 = vsel %vm109, %v301, 0.0
    %330 = vadd.xlane.f32.xlu0 %v329
    %v331 = vpop.xlane.xlu0 %330
    %v332 = vsel %vm109, %v302, 0.0
    %333 = vadd.xlane.f32.xlu0 %v332
    %v334 = vpop.xlane.xlu0 %333
    %v335 = vsel %vm109, %v303, 0.0
    %336 = vadd.xlane.f32.xlu0 %v335
    %v337 = vpop.xlane.xlu0 %336
    %v338 = vsel %vm109, %v304, 0.0
    %339 = vadd.xlane.f32.xlu0 %v338
    %v340 = vpop.xlane.xlu0 %339
    %v341 = vsel %vm109, %v305, 0.0
    %342 = vadd.xlane.f32.xlu0 %v341
    %v343 = vpop.xlane.xlu0 %342
    %v344 = vsel %vm109, %v306, 0.0
    %345 = vadd.xlane.f32.xlu0 %v344
    %v346 = vpop.xlane.xlu0 %345
    %v347 = vsel %vm109, %v307, 0.0
    %348 = vadd.xlane.f32.xlu0 %v347
    %v349 = vpop.xlane.xlu0 %348
    %v350 = vsel %vm109, %v308, 0.0
    %351 = vadd.xlane.f32.xlu0 %v350
    %v352 = vpop.xlane.xlu0 %351
    %v353 = vsel %vm109, %v309, 0.0
    %354 = vadd.xlane.f32.xlu0 %v353
    %v355 = vpop.xlane.xlu0 %354
    %v356 = vsel %vm109, %v310, 0.0
    %357 = vadd.xlane.f32.xlu0 %v356
    %v358 = vpop.xlane.xlu0 %357
    %v359 = vmul.f32 %v249, 0.03125
    %v360 = vmul.f32 %v252, 0.03125
    %v361 = vmul.f32 %v255, 0.03125
    %v362 = vmul.f32 %v258, 0.03125
    %v363 = vmul.f32 %v261, 0.03125
    %v364 = vmul.f32 %v264, 0.03125
    %v365 = vmul.f32 %v267, 0.03125
    %v366 = vmul.f32 %v270, 0.03125
    %v367 = vmul.f32 %v273, 0.03125
    %v368 = vmul.f32 %v276, 0.03125
    %v369 = vmul.f32 %v279, 0.03125
    %v370 = vmul.f32 %v282, 0.03125
    %v371 = vmul.f32 %v285, 0.03125
    %v372 = vmul.f32 %v288, 0.03125
    %v373 = vmul.f32 %v291, 0.03125
    %v374 = vmul.f32 %v294, 0.03125
    %v375 = vmul.f32 %v313, 0.03125
    %v376 = vmul.f32 %v316, 0.03125
    %v377 = vmul.f32 %v319, 0.03125
    %v378 = vmul.f32 %v322, 0.03125
    %v379 = vmul.f32 %v325, 0.03125
    %v380 = vmul.f32 %v328, 0.03125
    %v381 = vmul.f32 %v331, 0.03125
    %v382 = vmul.f32 %v334, 0.03125
    %v383 = vmul.f32 %v337, 0.03125
    %v384 = vmul.f32 %v340, 0.03125
    %v385 = vmul.f32 %v343, 0.03125
    %v386 = vmul.f32 %v346, 0.03125
    %v387 = vmul.f32 %v349, 0.03125
    %v388 = vmul.f32 %v352, 0.03125
    %v389 = vmul.f32 %v355, 0.03125
    %v390 = vmul.f32 %v358, 0.03125
    %v391 = vmul.f32 %v359, %v359
    %v392 = vmul.f32 %v360, %v360
    %v393 = vmul.f32 %v361, %v361
    %v394 = vmul.f32 %v362, %v362
    %v395 = vmul.f32 %v363, %v363
    %v396 = vmul.f32 %v364, %v364
    %v397 = vmul.f32 %v365, %v365
    %v398 = vmul.f32 %v366, %v366
    %v399 = vmul.f32 %v367, %v367
    %v400 = vmul.f32 %v368, %v368
    %v401 = vmul.f32 %v369, %v369
    %v402 = vmul.f32 %v370, %v370
    %v403 = vmul.f32 %v371, %v371
    %v404 = vmul.f32 %v372, %v372
    %v405 = vmul.f32 %v373, %v373
    %v406 = vmul.f32 %v374, %v374
    %v407 = vsub.f32 %v375, %v391
    %v408 = vsub.f32 %v376, %v392
    %v409 = vsub.f32 %v377, %v393
    %v410 = vsub.f32 %v378, %v394
    %v411 = vsub.f32 %v379, %v395
    %v412 = vsub.f32 %v380, %v396
    %v413 = vsub.f32 %v381, %v397
    %v414 = vsub.f32 %v382, %v398
    %v415 = vsub.f32 %v383, %v399
    %v416 = vsub.f32 %v384, %v400
    %v417 = vsub.f32 %v385, %v401
    %v418 = vsub.f32 %v386, %v402
    %v419 = vsub.f32 %v387, %v403
    %v420 = vsub.f32 %v388, %v404
    %v421 = vsub.f32 %v389, %v405
    %v422 = vsub.f32 %v390, %v406
    %v423 = vsub.f32 %v231, %v359
    %v424 = vsub.f32 %v232, %v360
    %v425 = vsub.f32 %v233, %v361
    %v426 = vsub.f32 %v234, %v362
    %v427 = vsub.f32 %v235, %v363
    %v428 = vsub.f32 %v236, %v364
    %v429 = vsub.f32 %v237, %v365
    %v430 = vsub.f32 %v238, %v366
    %v431 = vsub.f32 %v239, %v367
    %v432 = vsub.f32 %v240, %v368
    %v433 = vsub.f32 %v241, %v369
    %v434 = vsub.f32 %v242, %v370
    %v435 = vsub.f32 %v243, %v371
    %v436 = vsub.f32 %v244, %v372
    %v437 = vsub.f32 %v245, %v373
    %v438 = vsub.f32 %v246, %v374
    %v439 = vadd.f32 %v407, 1e-05
    %v440 = vadd.f32 %v408, 1e-05
    %v441 = vadd.f32 %v409, 1e-05
    %v442 = vadd.f32 %v410, 1e-05
    %v443 = vadd.f32 %v411, 1e-05
    %v444 = vadd.f32 %v412, 1e-05
    %v445 = vadd.f32 %v413, 1e-05
    %v446 = vadd.f32 %v414, 1e-05
    %v447 = vadd.f32 %v415, 1e-05
    %v448 = vadd.f32 %v416, 1e-05
    %v449 = vadd.f32 %v417, 1e-05
    %v450 = vadd.f32 %v418, 1e-05
    %v451 = vadd.f32 %v419, 1e-05
    %v452 = vadd.f32 %v420, 1e-05
    %v453 = vadd.f32 %v421, 1e-05
    %v454 = vadd.f32 %v422, 1e-05
    %v455 = vrsqrt.pop %v439
    %v456 = vrsqrt.pop %v440
    %v457 = vrsqrt.pop %v441
    %v458 = vrsqrt.pop %v442
    %v459 = vrsqrt.pop %v443
    %v460 = vrsqrt.pop %v444
    %v461 = vrsqrt.pop %v445
    %v462 = vrsqrt.pop %v446
    %v463 = vrsqrt.pop %v447
    %v464 = vrsqrt.pop %v448
    %v465 = vrsqrt.pop %v449
    %v466 = vrsqrt.pop %v450
    %v467 = vrsqrt.pop %v451
    %v468 = vrsqrt.pop %v452
    %v469 = vrsqrt.pop %v453
    %v470 = vrsqrt.pop %v454
    %v471 = vmul.f32 %v423, %v455
    %v472 = vmul.f32 %v424, %v456
    %v473 = vmul.f32 %v425, %v457
    %v474 = vmul.f32 %v426, %v458
    %v475 = vmul.f32 %v427, %v459
    %v476 = vmul.f32 %v428, %v460
    %v477 = vmul.f32 %v429, %v461
    %v478 = vmul.f32 %v430, %v462
    %v479 = vmul.f32 %v431, %v463
    %v480 = vmul.f32 %v432, %v464
    %v481 = vmul.f32 %v433, %v465
    %v482 = vmul.f32 %v434, %v466
    %v483 = vmul.f32 %v435, %v467
    %v484 = vmul.f32 %v436, %v468
    %v485 = vmul.f32 %v437, %v469
    %v486 = vmul.f32 %v438, %v470
    %v487 = vld [vmem:[%s3] sm:$0x1]
    %v489 = vlaneseq
    %v490 = vshrl.u32 %v489, 7
    %v491 = vsub.s32 0, %v490
    %v492 = vrot.slane %v487, %v491
    %v494 = vmul.f32 %v471, %v492
    %v495 = vmul.f32 %v472, %v492
    %v496 = vmul.f32 %v473, %v492
    %v497 = vmul.f32 %v474, %v492
    %v498 = vmul.f32 %v475, %v492
    %v499 = vmul.f32 %v476, %v492
    %v500 = vmul.f32 %v477, %v492
    %v501 = vmul.f32 %v478, %v492
    %v502 = vmul.f32 %v479, %v492
    %v503 = vmul.f32 %v480, %v492
    %v504 = vmul.f32 %v481, %v492
    %v505 = vmul.f32 %v482, %v492
    %v506 = vmul.f32 %v483, %v492
    %v507 = vmul.f32 %v484, %v492
    %v508 = vmul.f32 %v485, %v492
    %v509 = vmul.f32 %v486, %v492
    %v510 = vld [vmem:[%s4] sm:$0x1]
    %v512 = vlaneseq
    %v513 = vshrl.u32 %v512, 7
    %v514 = vsub.s32 0, %v513
    %v515 = vrot.slane %v510, %v514
    %v517 = vadd.f32 %v494, %v515
    %v518 = vadd.f32 %v495, %v515
    %v519 = vadd.f32 %v496, %v515
    %v520 = vadd.f32 %v497, %v515
    %v521 = vadd.f32 %v498, %v515
    %v522 = vadd.f32 %v499, %v515
    %v523 = vadd.f32 %v500, %v515
    %v524 = vadd.f32 %v501, %v515
    %v525 = vadd.f32 %v502, %v515
    %v526 = vadd.f32 %v503, %v515
    %v527 = vadd.f32 %v504, %v515
    %v528 = vadd.f32 %v505, %v515
    %v529 = vadd.f32 %v506, %v515
    %v530 = vadd.f32 %v507, %v515
    %v531 = vadd.f32 %v508, %v515
    %v532 = vadd.f32 %v509, %v515
    %v533 = vld [vmem:[%s5] sm:$0x1]
    %v534 = vld [vmem:[#allocation2] sm:$0x1]
    %536 = vset.pattern.permute.xlu0 0
    %537 = vperm.xlu0 %536, %v534
    %v538 = vpop.permute.xlu0 %537
    %v540 = vlaneseq
    %v541 = vshrl.u32 %v540, 7
    %v542 = vsub.s32 0, %v541
    %v543 = vrot.slane %v538, %v542
    %v545 = vsel %vm109, %v533, 0
    %v548 = vsel %vm109, %v517, 0
    %v551 = vsel %vm109, %v518, 0
    %v554 = vsel %vm109, %v519, 0
    %v557 = vsel %vm109, %v520, 0
    %v560 = vsel %vm109, %v521, 0
    %v563 = vsel %vm109, %v522, 0
    %v566 = vsel %vm109, %v523, 0
    %v569 = vsel %vm109, %v524, 0
    %v572 = vsel %vm109, %v525, 0
    %v575 = vsel %vm109, %v526, 0
    %v578 = vsel %vm109, %v527, 0
    %v581 = vsel %vm109, %v528, 0
    %v584 = vsel %vm109, %v529, 0
    %v587 = vsel %vm109, %v530, 0
    %v590 = vsel %vm109, %v531, 0
    %v593 = vsel %vm109, %v532, 0
    %595 = vmatprep.subr.mxu0 0.0
    %596 = vmatpush1.xpose.msra.mxu0 %v548
    %597 = vmatprep.subr.mxu0 0.0
    %598 = vmatpush1.xpose.msra.mxu0 %v551
    %599 = vmatprep.subr.mxu0 0.0
    %600 = vmatpush1.xpose.msra.mxu0 %v554
    %601 = vmatprep.subr.mxu0 0.0
    %602 = vmatpush1.xpose.msra.mxu0 %v557
    %603 = vmatprep.subr.mxu0 0.0
    %604 = vmatpush1.xpose.msra.mxu0 %v560
    %605 = vmatprep.subr.mxu0 0.0
    %606 = vmatpush1.xpose.msra.mxu0 %v563
    %607 = vmatprep.subr.mxu0 0.0
    %608 = vmatpush1.xpose.msra.mxu0 %v566
    %609 = vmatprep.subr.mxu0 0.0
    %610 = vmatpush1.xpose.msra.mxu0 %v569
    %611 = vmatprep.subr.mxu0 0.0
    %612 = vmatpush1.xpose.msra.mxu0 %v572
    %613 = vmatprep.subr.mxu0 0.0
    %614 = vmatpush1.xpose.msra.mxu0 %v575
    %615 = vmatprep.subr.mxu0 0.0
    %616 = vmatpush1.xpose.msra.mxu0 %v578
    %617 = vmatprep.subr.mxu0 0.0
    %618 = vmatpush1.xpose.msra.mxu0 %v581
    %619 = vmatprep.subr.mxu0 0.0
    %620 = vmatpush1.xpose.msra.mxu0 %v584
    %621 = vmatprep.subr.mxu0 0.0
    %622 = vmatpush1.xpose.msra.mxu0 %v587
    %623 = vmatprep.subr.mxu0 0.0
    %624 = vmatpush1.xpose.msra.mxu0 %v590
    %625 = vmatprep.subr.mxu0 0.0
    %626 = vmatpush1.xpose.msra.mxu0 %v593
    %627 = vmatprep.subr.mxu0 0.0
    %628 = vmatpush1.xpose.msra.mxu0 0.0
    %629 = vmatprep.subr.mxu0 0.0
    %630 = vmatpush1.xpose.msra.mxu0 0.0
    %631 = vmatprep.subr.mxu0 0.0
    %632 = vmatpush1.xpose.msra.mxu0 0.0
    %633 = vmatprep.subr.mxu0 0.0
    %634 = vmatpush1.xpose.msra.mxu0 0.0
    %635 = vmatprep.subr.mxu0 0.0
    %636 = vmatpush1.xpose.msra.mxu0 0.0
    %637 = vmatprep.subr.mxu0 0.0
    %638 = vmatpush1.xpose.msra.mxu0 0.0
    %639 = vmatprep.subr.mxu0 0.0
    %640 = vmatpush1.xpose.msra.mxu0 0.0
    %641 = vmatprep.subr.mxu0 0.0
    %642 = vmatpush1.xpose.msra.mxu0 0.0
    %643 = vmatprep.subr.mxu0 0.0
    %644 = vmatpush1.xpose.msra.mxu0 0.0
    %645 = vmatprep.subr.mxu0 0.0
    %646 = vmatpush1.xpose.msra.mxu0 0.0
    %647 = vmatprep.subr.mxu0 0.0
    %648 = vmatpush1.xpose.msra.mxu0 0.0
    %649 = vmatprep.subr.mxu0 0.0
    %650 = vmatpush1.xpose.msra.mxu0 0.0
    %651 = vmatprep.subr.mxu0 0.0
    %652 = vmatpush1.xpose.msra.mxu0 0.0
    %653 = vmatprep.subr.mxu0 0.0
    %654 = vmatpush1.xpose.msra.mxu0 0.0
    %655 = vmatprep.subr.mxu0 0.0
    %656 = vmatpush1.xpose.msra.mxu0 0.0
    %657 = vmatprep.subr.mxu0 0.0
    %658 = vmatpush1.xpose.msra.mxu0 0.0
    %659 = vmatprep.mubr.f32.mxu0 0.0
    %660 = vmatmul.mubr.f32.gmra.mrb[0].mxu0 %v545
    %v661 = vpop.f32.mrb[0].mxu0
    %v662 = vadd.f32 %v543, %v661
    %v663 = vpop.f32.mrb[0].mxu0
    %664 = vdwg.mxu0
    %665 = vst [vmem:[#allocation3] sm:$0x1] %v662
    // Predicated region
    $region30: #{tpu_custom_call.1} parent=1 // pred_check
      _
    $region31: #{tpu_custom_call.1} parent=1 // pred_check_branch
      %667 = sbr.rel (0) target = $region33
    $region32: #{tpu_custom_call.1} parent=1 // pred_region
      %s669 = ssub.s32 16, 16
      %670 = vsyncadd [#allocation4], %s669
      %s672 = sshll.u32 [#allocation3], 4
      %s673 = int_to_ptr.vmem [resolvable:$true] %s672
      %675 = dma.vmem_to_hbm [thread:$0]  %s673, 16, %s7, [#allocation4]
    $region33: #{tpu_custom_call.1} parent=1 // pred_fallthru
      _
    // Predicated region
    $region34: #{tpu_custom_call.1} parent=1 // pred_check
      _
    $region35: #{tpu_custom_call.1} parent=1 // pred_check_branch
      %677 = sbr.rel (0) target = $region37
    $region36: #{tpu_custom_call.1} parent=1 // pred_region
      %678 = dma.done [#allocation4], 16
    $region37: #{tpu_custom_call.1} parent=1 // pred_fallthru
      _
    %679 = vsyncpa [#allocation4], 1

</llo_original>
